<compile_context>
chip_gen: v7x
topology: tpu7x:2x2x1
jax: 0.10.0
libtpu: 0.0.40
codegen_flags: <defaults>
</compile_context>

<pallas_src>
import functools

import jax
import jax.numpy as jnp
from jax.experimental import pallas as pl
from jax.experimental.pallas import tpu as pltpu

# ---------------- hyper-params (synthetic, deterministic) ----------------
EMB_DIM = 32
LAMBDA = 0.5
NOISE_RATE = 0.75
NEG_SAMPLE_NUM = 2
SCORE_FUNC = "bias_product"   # forward() requires the bias_* attributes


def _full_spec(shape):
    # full-array block, grid=(1,)
    return pl.BlockSpec(shape, lambda *_: (0,) * len(shape))


# ---------------- fused Pallas kernel ----------------

def _hem_fused_kernel(qw_ref, invq_ref, wt_ref, qb_ref, uemb_ref, iemb_ref,
                      yu_ref, bu_ref, wu_ref, wtu_ref,
                      yi_ref, bi_ref, wi_ref, wti_ref,
                      yq_ref, bq2_ref, wq2_ref, wtq2_ref,
                      out_ref, *, lam):
    # ---- personalized query ----
    # query-word mean (multiply by precomputed 1/len), Linear with pre-transposed W
    # (MXU), tanh (EUP), LAMBDA mix with the user embedding.
    q_emb = jnp.sum(qw_ref[...], axis=1) * invq_ref[...]                       # (B, D)
    proj = jnp.tanh(
        jnp.dot(q_emb, wt_ref[...], preferred_element_type=jnp.float32)
        + qb_ref[...])                                                         # (B, D)
    pq = lam * proj + (1.0 - lam) * uemb_ref[...]                              # (B, D)

    # ---- fused weighted BCE-with-logits over all pos|neg blocks ----
    # target and 1/N (torch 'mean' reduction) are already folded into w / wt.
    def group_loss(x, y, bias, w, wt):
        # batched score on the MXU: (B,1,D) x (B,L,D) -> (B,1,L)
        s = jnp.einsum("bqd,bld->bql", x[:, None, :], y,
                       preferred_element_type=jnp.float32) + bias
        # numerically-stable BCEWithLogits, weights carry mask * target * 1/N
        return jnp.sum(w * jnp.maximum(s, 0.0) - wt * s
                       + w * jnp.log1p(jnp.exp(-jnp.abs(s))))

    total = (group_loss(uemb_ref[...], yu_ref[...], bu_ref[...], wu_ref[...], wtu_ref[...])
             + group_loss(iemb_ref[...], yi_ref[...], bi_ref[...], wi_ref[...], wti_ref[...])
             + group_loss(pq, yq_ref[...], bq2_ref[...], wq2_ref[...], wtq2_ref[...]))

    out_ref[0, 0] = total    # scalar result -> SMEM (no masked VMEM partial store)


def hem_loss_pallas(inp, lam):
    arrays = [inp["qw"], inp["inv_qlen"], inp["w_t"], inp["qb"],
              inp["uemb"], inp["iemb"],
              inp["yu"], inp["biasu"], inp["wu"], inp["wtu"],
              inp["yi"], inp["biasi"], inp["wi"], inp["wti"],
              inp["yq"], inp["biasq"], inp["wq"], inp["wtq"]]
    B, _, D = inp["qw"].shape
    l_sum = inp["yu"].shape[1] + inp["yi"].shape[1] + inp["yq"].shape[1]
    cost = pl.CostEstimate(
        flops=int(2 * B * D * D + 2 * B * l_sum * D + 12 * B * l_sum + 4 * B * D),
        transcendentals=int(B * D + 2 * B * l_sum),
        bytes_accessed=int(4 * (sum(int(a.size) for a in arrays) + 1)))

    out = pl.pallas_call(
        functools.partial(_hem_fused_kernel, lam=float(lam)),
        out_shape=jax.ShapeDtypeStruct((1, 1), jnp.float32),
        grid=(1,),
        in_specs=[_full_spec(a.shape) for a in arrays],
        out_specs=pl.BlockSpec(memory_space=pltpu.MemorySpace.SMEM),
        cost_estimate=cost,
    )(*arrays)
    return out[0, 0]


# ---------------- pure-JAX reference (for verification) ----------------

def hem_loss_ref(inp, lam):
    q_emb = jnp.sum(inp["qw"], axis=1) * inp["inv_qlen"]
    proj = jnp.tanh(q_emb @ inp["w_t"] + inp["qb"])
    pq = lam * proj + (1.0 - lam) * inp["uemb"]

    def grp(x, y, bias, w, wt):
        s = jnp.sum(x[:, None, :] * y, axis=-1)[:, None, :] + bias
        return jnp.sum(w * jnp.maximum(s, 0.0) - wt * s
                       + w * jnp.log1p(jnp.exp(-jnp.abs(s))))

    return (grp(inp["uemb"], inp["yu"], inp["biasu"], inp["wu"], inp["wtu"])
            + grp(inp["iemb"], inp["yi"], inp["biasi"], inp["wi"], inp["wti"])
            + grp(pq, inp["yq"], inp["biasq"], inp["wq"], inp["wtq"]))


# ---------------- HEM glue: gathers, masking, noise sampling ----------------

def sequence_mask_lt(lens, maxlen):
    return (jnp.arange(maxlen)[None, :] < lens[:, None]).astype(jnp.float32)


def build_hem_inputs(params, tables, x, key):
    """Builds every operand of the fused kernel (pure-JAX glue; one-time layout work)."""
    word_emb = params["word_embedding"]   # (W, D)
    user_emb = params["user_embedding"]   # (U, D)
    item_emb = params["item_embedding"]   # (I, D)
    D = word_emb.shape[1]

    # append_zero_vec()
    word_emb_z = jnp.concatenate([word_emb, jnp.zeros((1, D), jnp.float32)], 0)
    word_bias_z = jnp.concatenate([params["word_bias"], jnp.zeros((1,), jnp.float32)], 0)
    item_bias_z = jnp.concatenate([params["item_bias"], jnp.zeros((1,), jnp.float32)], 0)

    B = x.shape[0]
    user_ids, query_ids, item_ids = x[:, 0], x[:, 1], x[:, 2]
    user_emb_b = user_emb[user_ids]                         # (B, D)
    item_emb_b = item_emb[item_ids]                         # (B, D)

    qw_idx = tables["query_seg_map"][query_ids].reshape(-1)
    qw_batch = word_emb_z[qw_idx].reshape(B, -1, D)
    inv_qlens = 1.0 / tables["query_seg_lens"][query_ids].reshape(B, 1).astype(jnp.float32)

    k_user, k_item, k_uqi = jax.random.split(key, 3)

    def gen_group(ex_ids, word_map, word_lens, word_dist, k):
        # positive block: words attached to the example
        L = word_map.shape[1]
        widx = word_map[ex_ids].reshape(-1)
        y_pos = word_emb_z[widx].reshape(B, L, D)
        bias_pos = word_bias_z[widx].reshape(B, L)
        lens_b = word_lens[ex_ids]
        mask_pos = sequence_mask_lt(lens_b, L)

        # negative block: NCE noise words.
        # TODO(synk): torch WeightedRandomSampler is stochastic; replaced by a
        # deterministic jax.random.categorical draw on word_dist**noise_rate.
        Ln = L * NEG_SAMPLE_NUM
        logits = NOISE_RATE * jnp.log(word_dist)
        noise_ids = jax.random.categorical(k, logits, shape=(B * Ln,))
        y_neg = word_emb[noise_ids].reshape(B, Ln, D)        # (matches torch: no zero row)
        bias_neg = word_bias_z[noise_ids].reshape(B, Ln)
        mask_neg = sequence_mask_lt(lens_b * NEG_SAMPLE_NUM, Ln)

        # concat pos|neg along L; fold target (1|0) and the 1/N mean factor into weights
        y = jnp.concatenate([y_pos, y_neg], axis=1)
        bias = jnp.concatenate([bias_pos, bias_neg], axis=1)
        w = jnp.concatenate([mask_pos / (B * L), mask_neg / (B * Ln)], axis=1)
        wt = jnp.concatenate([mask_pos / (B * L), jnp.zeros_like(mask_neg)], axis=1)
        # bias / w / wt shaped (B, 1, L_total) so the kernel needs no squeeze of the
        # (B, 1, L) MXU score.
        return y, bias[:, None, :], w[:, None, :], wt[:, None, :]

    yu, biasu, wu, wtu = gen_group(user_ids, tables["user_word_map"],
                                   tables["user_word_lens"],
                                   tables["word_distribution"], k_user)
    yi, biasi, wi, wti = gen_group(item_ids, tables["item_title_map"],
                                   tables["item_title_lens"],
                                   tables["word_distribution"], k_item)

    # (u, q, i) block: positive item + NCE noise items
    item_logits = NOISE_RATE * jnp.log(tables["item_distribution"])
    noise_item_ids = jax.random.categorical(k_uqi, item_logits,
                                            shape=(B * NEG_SAMPLE_NUM,))
    yq = jnp.concatenate([item_emb_b.reshape(B, 1, D),
                          item_emb[noise_item_ids].reshape(B, NEG_SAMPLE_NUM, D)], axis=1)
    biasq = jnp.concatenate([item_bias_z[item_ids].reshape(B, 1),
                             item_bias_z[noise_item_ids].reshape(B, NEG_SAMPLE_NUM)], axis=1)
    wq = jnp.concatenate([jnp.full((B, 1), 1.0 / B, jnp.float32),
                          jnp.full((B, NEG_SAMPLE_NUM), 1.0 / (B * NEG_SAMPLE_NUM),
                                   jnp.float32)], axis=1)
    wtq = jnp.concatenate([jnp.full((B, 1), 1.0 / B, jnp.float32),
                           jnp.zeros((B, NEG_SAMPLE_NUM), jnp.float32)], axis=1)

    return dict(
        qw=qw_batch, inv_qlen=inv_qlens,
        w_t=params["query_w"].T,          # pre-transposed: kernel does q_emb @ w_t
        qb=params["query_b"],
        uemb=user_emb_b, iemb=item_emb_b,
        yu=yu, biasu=biasu, wu=wu, wtu=wtu,
        yi=yi, biasi=biasi, wi=wi, wti=wti,
        yq=yq, biasq=biasq[:, None, :], wq=wq[:, None, :], wtq=wtq[:, None, :])


# ---------------- deterministic synthetic setup ----------------

def make_map(key, n_rows, seq_len, vocab):
    k1, k2 = jax.random.split(key)
    ids = jax.random.randint(k1, (n_rows, seq_len), 0, vocab)
    lens = jax.random.randint(k2, (n_rows,), 1, seq_len + 1)
    mask = jnp.arange(seq_len)[None, :] < lens[:, None]
    ids = jnp.where(mask, ids, vocab)     # padded slots -> zero-vector row
    return ids, lens


if __name__ == "__main__":
    word_num, item_num, user_num = 50, 20, 10
    num_queries, Lq, Lu, Li = 8, 5, 6, 6
    B, D = 2, EMB_DIM

    root = jax.random.PRNGKey(0)
    ks = jax.random.split(root, 16)

    params = {
        "word_embedding": 0.1 * jax.random.normal(ks[0], (word_num, D), jnp.float32),
        "user_embedding": 0.1 * jax.random.normal(ks[1], (user_num, D), jnp.float32),
        "item_embedding": 0.1 * jax.random.normal(ks[2], (item_num, D), jnp.float32),
        "query_w": 0.1 * jax.random.normal(ks[3], (D, D), jnp.float32),
        "query_b": 0.1 * jax.random.normal(ks[4], (1, D), jnp.float32),
        "word_bias": 0.1 * jax.random.normal(ks[5], (word_num,), jnp.float32),
        "item_bias": 0.1 * jax.random.normal(ks[6], (item_num,), jnp.float32),
    }

    user_word_map, user_word_lens = make_map(ks[7], user_num, Lu, word_num)
    item_title_map, item_title_lens = make_map(ks[8], item_num, Li, word_num)
    query_seg_map, query_seg_lens = make_map(ks[9], num_queries, Lq, word_num)

    tables = {
        "user_word_map": user_word_map, "user_word_lens": user_word_lens,
        "item_title_map": item_title_map, "item_title_lens": item_title_lens,
        "query_seg_map": query_seg_map, "query_seg_lens": query_seg_lens,
        "word_distribution": jax.random.uniform(ks[10], (word_num,),
                                                minval=0.1, maxval=1.0),
        "item_distribution": jax.random.uniform(ks[11], (item_num,),
                                                minval=0.1, maxval=1.0),
    }

    # x: (B, 3) = [user_id, query_id, item_id]
    x = jnp.stack([
        jax.random.randint(ks[12], (B,), 0, user_num),
        jax.random.randint(ks[13], (B,), 0, num_queries),
        jax.random.randint(ks[14], (B,), 0, item_num),
    ], axis=1)

    noise_key = ks[15]

    inputs = build_hem_inputs(params, tables, x, noise_key)

    loss_pallas = jax.block_until_ready(hem_loss_pallas(inputs, LAMBDA))
    loss_ref = jax.block_until_ready(hem_loss_ref(inputs, LAMBDA))

    assert jnp.isfinite(loss_pallas)
    assert jnp.allclose(loss_pallas, loss_ref, atol=1e-3, rtol=1e-3), (
        float(loss_pallas), float(loss_ref))

    print("KERNEL_OK")
</pallas_src>

<mosaic_0001>
module attributes {stable_mosaic.version = 11 : i64} {
  func.func @_hem_fused_kernel(%arg0: i32, %arg1: memref<2x5x32xf32, #tpu.memory_space<vmem>>, %arg2: memref<2x1xf32, #tpu.memory_space<vmem>>, %arg3: memref<32x32xf32, #tpu.memory_space<vmem>>, %arg4: memref<1x32xf32, #tpu.memory_space<vmem>>, %arg5: memref<2x32xf32, #tpu.memory_space<vmem>>, %arg6: memref<2x32xf32, #tpu.memory_space<vmem>>, %arg7: memref<2x18x32xf32, #tpu.memory_space<vmem>>, %arg8: memref<2x1x18xf32, #tpu.memory_space<vmem>>, %arg9: memref<2x1x18xf32, #tpu.memory_space<vmem>>, %arg10: memref<2x1x18xf32, #tpu.memory_space<vmem>>, %arg11: memref<2x18x32xf32, #tpu.memory_space<vmem>>, %arg12: memref<2x1x18xf32, #tpu.memory_space<vmem>>, %arg13: memref<2x1x18xf32, #tpu.memory_space<vmem>>, %arg14: memref<2x1x18xf32, #tpu.memory_space<vmem>>, %arg15: memref<2x3x32xf32, #tpu.memory_space<vmem>>, %arg16: memref<2x1x3xf32, #tpu.memory_space<vmem>>, %arg17: memref<2x1x3xf32, #tpu.memory_space<vmem>>, %arg18: memref<2x1x3xf32, #tpu.memory_space<vmem>>, %arg19: memref<1x1xf32, #tpu.memory_space<smem>>) attributes {dimension_semantics = [#tpu.dimension_semantics<arbitrary>], iteration_bounds = array<i64: 1>, scalar_prefetch = 0 : i64, scratch_operands = 0 : i64, tpu.core_type = #tpu.core_type<tc>, window_params = [{pipeline_mode = #tpu.pipeline_mode<synchronous>, transform_indices = @transform_0, window_bounds = array<i64: 2, 5, 32>}, {pipeline_mode = #tpu.pipeline_mode<synchronous>, transform_indices = @transform_1, window_bounds = array<i64: 2, 1>}, {pipeline_mode = #tpu.pipeline_mode<synchronous>, transform_indices = @transform_2, window_bounds = array<i64: 32, 32>}, {pipeline_mode = #tpu.pipeline_mode<synchronous>, transform_indices = @transform_3, window_bounds = array<i64: 1, 32>}, {pipeline_mode = #tpu.pipeline_mode<synchronous>, transform_indices = @transform_4, window_bounds = array<i64: 2, 32>}, {pipeline_mode = #tpu.pipeline_mode<synchronous>, transform_indices = @transform_5, window_bounds = array<i64: 2, 32>}, {pipeline_mode = #tpu.pipeline_mode<synchronous>, transform_indices = @transform_6, window_bounds = array<i64: 2, 18, 32>}, {pipeline_mode = #tpu.pipeline_mode<synchronous>, transform_indices = @transform_7, window_bounds = array<i64: 2, 1, 18>}, {pipeline_mode = #tpu.pipeline_mode<synchronous>, transform_indices = @transform_8, window_bounds = array<i64: 2, 1, 18>}, {pipeline_mode = #tpu.pipeline_mode<synchronous>, transform_indices = @transform_9, window_bounds = array<i64: 2, 1, 18>}, {pipeline_mode = #tpu.pipeline_mode<synchronous>, transform_indices = @transform_10, window_bounds = array<i64: 2, 18, 32>}, {pipeline_mode = #tpu.pipeline_mode<synchronous>, transform_indices = @transform_11, window_bounds = array<i64: 2, 1, 18>}, {pipeline_mode = #tpu.pipeline_mode<synchronous>, transform_indices = @transform_12, window_bounds = array<i64: 2, 1, 18>}, {pipeline_mode = #tpu.pipeline_mode<synchronous>, transform_indices = @transform_13, window_bounds = array<i64: 2, 1, 18>}, {pipeline_mode = #tpu.pipeline_mode<synchronous>, transform_indices = @transform_14, window_bounds = array<i64: 2, 3, 32>}, {pipeline_mode = #tpu.pipeline_mode<synchronous>, transform_indices = @transform_15, window_bounds = array<i64: 2, 1, 3>}, {pipeline_mode = #tpu.pipeline_mode<synchronous>, transform_indices = @transform_16, window_bounds = array<i64: 2, 1, 3>}, {pipeline_mode = #tpu.pipeline_mode<synchronous>, transform_indices = @transform_17, window_bounds = array<i64: 2, 1, 3>}, {transform_indices = @transform_18, window_bounds = array<i64: 1, 1>}]} {
    %c0 = arith.constant 0 : index
    %c0_0 = arith.constant 0 : index
    %c0_1 = arith.constant 0 : index
    %0 = vector.load %arg1[%c0, %c0_0, %c0_1] : memref<2x5x32xf32, #tpu.memory_space<vmem>>, vector<2x5x32xf32>
    %cst = arith.constant dense<0.000000e+00> : vector<2x32xf32>
    %1 = vector.multi_reduction <add>, %0, %cst [1] : vector<2x5x32xf32> to vector<2x32xf32>
    %c0_2 = arith.constant 0 : index
    %c0_3 = arith.constant 0 : index
    %2 = vector.load %arg2[%c0_2, %c0_3] : memref<2x1xf32, #tpu.memory_space<vmem>>, vector<2x1xf32>
    %3 = vector.broadcast %2 : vector<2x1xf32> to vector<2x32xf32>
    %4 = arith.mulf %1, %3 : vector<2x32xf32>
    %c0_4 = arith.constant 0 : index
    %c0_5 = arith.constant 0 : index
    %5 = vector.load %arg3[%c0_4, %c0_5] : memref<32x32xf32, #tpu.memory_space<vmem>>, vector<32x32xf32>
    %cst_6 = arith.constant dense<0.000000e+00> : vector<2x32xf32>
    %6 = tpu.matmul %4, %5, %cst_6 {dimension_numbers = #tpu.dot_dimension_numbers<[1], [0], [0], [1], [0, 0, 1, 1], [], []>} : vector<2x32xf32>, vector<32x32xf32>, vector<2x32xf32> -> vector<2x32xf32>
    %c0_7 = arith.constant 0 : index
    %c0_8 = arith.constant 0 : index
    %7 = vector.load %arg4[%c0_7, %c0_8] : memref<1x32xf32, #tpu.memory_space<vmem>>, vector<1x32xf32>
    %8 = vector.broadcast %7 : vector<1x32xf32> to vector<2x32xf32>
    %9 = arith.addf %6, %8 : vector<2x32xf32>
    %10 = math.tanh %9 : vector<2x32xf32>
    %cst_9 = arith.constant 5.000000e-01 : f32
    %11 = vector.broadcast %cst_9 : f32 to vector<2x32xf32>
    %12 = arith.mulf %11, %10 : vector<2x32xf32>
    %c0_10 = arith.constant 0 : index
    %c0_11 = arith.constant 0 : index
    %13 = vector.load %arg5[%c0_10, %c0_11] : memref<2x32xf32, #tpu.memory_space<vmem>>, vector<2x32xf32>
    %cst_12 = arith.constant 5.000000e-01 : f32
    %14 = vector.broadcast %cst_12 : f32 to vector<2x32xf32>
    %15 = arith.mulf %14, %13 : vector<2x32xf32>
    %16 = arith.addf %12, %15 : vector<2x32xf32>
    %c0_13 = arith.constant 0 : index
    %c0_14 = arith.constant 0 : index
    %17 = vector.load %arg5[%c0_13, %c0_14] : memref<2x32xf32, #tpu.memory_space<vmem>>, vector<2x32xf32>
    %c0_15 = arith.constant 0 : index
    %c0_16 = arith.constant 0 : index
    %c0_17 = arith.constant 0 : index
    %18 = vector.load %arg7[%c0_15, %c0_16, %c0_17] : memref<2x18x32xf32, #tpu.memory_space<vmem>>, vector<2x18x32xf32>
    %c0_18 = arith.constant 0 : index
    %c0_19 = arith.constant 0 : index
    %c0_20 = arith.constant 0 : index
    %19 = vector.load %arg8[%c0_18, %c0_19, %c0_20] : memref<2x1x18xf32, #tpu.memory_space<vmem>>, vector<2x1x18xf32>
    %c0_21 = arith.constant 0 : index
    %c0_22 = arith.constant 0 : index
    %c0_23 = arith.constant 0 : index
    %20 = vector.load %arg9[%c0_21, %c0_22, %c0_23] : memref<2x1x18xf32, #tpu.memory_space<vmem>>, vector<2x1x18xf32>
    %c0_24 = arith.constant 0 : index
    %c0_25 = arith.constant 0 : index
    %c0_26 = arith.constant 0 : index
    %21 = vector.load %arg10[%c0_24, %c0_25, %c0_26] : memref<2x1x18xf32, #tpu.memory_space<vmem>>, vector<2x1x18xf32>
    %22 = vector.shape_cast %17 : vector<2x32xf32> to vector<2x1x32xf32>
    "tpu.trace_start"() <{level = 10 : i32, message = "bqd,bld->bql"}> : () -> ()
    %cst_27 = arith.constant dense<0.000000e+00> : vector<2x1x18xf32>
    %23 = tpu.matmul %22, %18, %cst_27 {dimension_numbers = #tpu.dot_dimension_numbers<[2], [2], [1], [1], [0, 0, 0, 1, 1, 1], [0], [0]>} : vector<2x1x32xf32>, vector<2x18x32xf32>, vector<2x1x18xf32> -> vector<2x1x18xf32>
    "tpu.trace_stop"() : () -> ()
    %24 = arith.addf %23, %19 : vector<2x1x18xf32>
    %cst_28 = arith.constant 0.000000e+00 : f32
    %25 = vector.broadcast %cst_28 : f32 to vector<2x1x18xf32>
    %26 = arith.maximumf %24, %25 : vector<2x1x18xf32>
    %27 = arith.mulf %20, %26 : vector<2x1x18xf32>
    %28 = arith.mulf %21, %24 : vector<2x1x18xf32>
    %29 = arith.subf %27, %28 : vector<2x1x18xf32>
    %30 = math.absf %24 : vector<2x1x18xf32>
    %cst_29 = arith.constant 0.000000e+00 : f32
    %31 = vector.broadcast %cst_29 : f32 to vector<2x1x18xf32>
    %32 = arith.subf %31, %30 : vector<2x1x18xf32>
    %33 = math.exp %32 : vector<2x1x18xf32>
    %34 = math.log1p %33 : vector<2x1x18xf32>
    %35 = arith.mulf %20, %34 : vector<2x1x18xf32>
    %36 = arith.addf %29, %35 : vector<2x1x18xf32>
    %37 = vector.shape_cast %36 : vector<2x1x18xf32> to vector<1x2x1x18xf32>
    %cst_30 = arith.constant dense<0.000000e+00> : vector<1xf32>
    %38 = vector.multi_reduction <add>, %37, %cst_30 [1, 2, 3] : vector<1x2x1x18xf32> to vector<1xf32>
    %39 = vector.shape_cast %38 : vector<1xf32> to vector<1x1x1x1xf32>
    %40 = vector.extract %39[0, 0, 0, 0] : f32 from vector<1x1x1x1xf32>
    %c0_31 = arith.constant 0 : index
    %c0_32 = arith.constant 0 : index
    %41 = vector.load %arg6[%c0_31, %c0_32] : memref<2x32xf32, #tpu.memory_space<vmem>>, vector<2x32xf32>
    %c0_33 = arith.constant 0 : index
    %c0_34 = arith.constant 0 : index
    %c0_35 = arith.constant 0 : index
    %42 = vector.load %arg11[%c0_33, %c0_34, %c0_35] : memref<2x18x32xf32, #tpu.memory_space<vmem>>, vector<2x18x32xf32>
    %c0_36 = arith.constant 0 : index
    %c0_37 = arith.constant 0 : index
    %c0_38 = arith.constant 0 : index
    %43 = vector.load %arg12[%c0_36, %c0_37, %c0_38] : memref<2x1x18xf32, #tpu.memory_space<vmem>>, vector<2x1x18xf32>
    %c0_39 = arith.constant 0 : index
    %c0_40 = arith.constant 0 : index
    %c0_41 = arith.constant 0 : index
    %44 = vector.load %arg13[%c0_39, %c0_40, %c0_41] : memref<2x1x18xf32, #tpu.memory_space<vmem>>, vector<2x1x18xf32>
    %c0_42 = arith.constant 0 : index
    %c0_43 = arith.constant 0 : index
    %c0_44 = arith.constant 0 : index
    %45 = vector.load %arg14[%c0_42, %c0_43, %c0_44] : memref<2x1x18xf32, #tpu.memory_space<vmem>>, vector<2x1x18xf32>
    %46 = vector.shape_cast %41 : vector<2x32xf32> to vector<2x1x32xf32>
    "tpu.trace_start"() <{level = 10 : i32, message = "bqd,bld->bql"}> : () -> ()
    %cst_45 = arith.constant dense<0.000000e+00> : vector<2x1x18xf32>
    %47 = tpu.matmul %46, %42, %cst_45 {dimension_numbers = #tpu.dot_dimension_numbers<[2], [2], [1], [1], [0, 0, 0, 1, 1, 1], [0], [0]>} : vector<2x1x32xf32>, vector<2x18x32xf32>, vector<2x1x18xf32> -> vector<2x1x18xf32>
    "tpu.trace_stop"() : () -> ()
    %48 = arith.addf %47, %43 : vector<2x1x18xf32>
    %cst_46 = arith.constant 0.000000e+00 : f32
    %49 = vector.broadcast %cst_46 : f32 to vector<2x1x18xf32>
    %50 = arith.maximumf %48, %49 : vector<2x1x18xf32>
    %51 = arith.mulf %44, %50 : vector<2x1x18xf32>
    %52 = arith.mulf %45, %48 : vector<2x1x18xf32>
    %53 = arith.subf %51, %52 : vector<2x1x18xf32>
    %54 = math.absf %48 : vector<2x1x18xf32>
    %cst_47 = arith.constant 0.000000e+00 : f32
    %55 = vector.broadcast %cst_47 : f32 to vector<2x1x18xf32>
    %56 = arith.subf %55, %54 : vector<2x1x18xf32>
    %57 = math.exp %56 : vector<2x1x18xf32>
    %58 = math.log1p %57 : vector<2x1x18xf32>
    %59 = arith.mulf %44, %58 : vector<2x1x18xf32>
    %60 = arith.addf %53, %59 : vector<2x1x18xf32>
    %61 = vector.shape_cast %60 : vector<2x1x18xf32> to vector<1x2x1x18xf32>
    %cst_48 = arith.constant dense<0.000000e+00> : vector<1xf32>
    %62 = vector.multi_reduction <add>, %61, %cst_48 [1, 2, 3] : vector<1x2x1x18xf32> to vector<1xf32>
    %63 = vector.shape_cast %62 : vector<1xf32> to vector<1x1x1x1xf32>
    %64 = vector.extract %63[0, 0, 0, 0] : f32 from vector<1x1x1x1xf32>
    %65 = arith.addf %40, %64 : f32
    %c0_49 = arith.constant 0 : index
    %c0_50 = arith.constant 0 : index
    %c0_51 = arith.constant 0 : index
    %66 = vector.load %arg15[%c0_49, %c0_50, %c0_51] : memref<2x3x32xf32, #tpu.memory_space<vmem>>, vector<2x3x32xf32>
    %c0_52 = arith.constant 0 : index
    %c0_53 = arith.constant 0 : index
    %c0_54 = arith.constant 0 : index
    %67 = vector.load %arg16[%c0_52, %c0_53, %c0_54] : memref<2x1x3xf32, #tpu.memory_space<vmem>>, vector<2x1x3xf32>
    %c0_55 = arith.constant 0 : index
    %c0_56 = arith.constant 0 : index
    %c0_57 = arith.constant 0 : index
    %68 = vector.load %arg17[%c0_55, %c0_56, %c0_57] : memref<2x1x3xf32, #tpu.memory_space<vmem>>, vector<2x1x3xf32>
    %c0_58 = arith.constant 0 : index
    %c0_59 = arith.constant 0 : index
    %c0_60 = arith.constant 0 : index
    %69 = vector.load %arg18[%c0_58, %c0_59, %c0_60] : memref<2x1x3xf32, #tpu.memory_space<vmem>>, vector<2x1x3xf32>
    %70 = vector.shape_cast %16 : vector<2x32xf32> to vector<2x1x32xf32>
    "tpu.trace_start"() <{level = 10 : i32, message = "bqd,bld->bql"}> : () -> ()
    %cst_61 = arith.constant dense<0.000000e+00> : vector<2x1x3xf32>
    %71 = tpu.matmul %70, %66, %cst_61 {dimension_numbers = #tpu.dot_dimension_numbers<[2], [2], [1], [1], [0, 0, 0, 1, 1, 1], [0], [0]>} : vector<2x1x32xf32>, vector<2x3x32xf32>, vector<2x1x3xf32> -> vector<2x1x3xf32>
    "tpu.trace_stop"() : () -> ()
    %72 = arith.addf %71, %67 : vector<2x1x3xf32>
    %cst_62 = arith.constant 0.000000e+00 : f32
    %73 = vector.broadcast %cst_62 : f32 to vector<2x1x3xf32>
    %74 = arith.maximumf %72, %73 : vector<2x1x3xf32>
    %75 = arith.mulf %68, %74 : vector<2x1x3xf32>
    %76 = arith.mulf %69, %72 : vector<2x1x3xf32>
    %77 = arith.subf %75, %76 : vector<2x1x3xf32>
    %78 = math.absf %72 : vector<2x1x3xf32>
    %cst_63 = arith.constant 0.000000e+00 : f32
    %79 = vector.broadcast %cst_63 : f32 to vector<2x1x3xf32>
    %80 = arith.subf %79, %78 : vector<2x1x3xf32>
    %81 = math.exp %80 : vector<2x1x3xf32>
    %82 = math.log1p %81 : vector<2x1x3xf32>
    %83 = arith.mulf %68, %82 : vector<2x1x3xf32>
    %84 = arith.addf %77, %83 : vector<2x1x3xf32>
    %85 = vector.shape_cast %84 : vector<2x1x3xf32> to vector<1x2x1x3xf32>
    %cst_64 = arith.constant dense<0.000000e+00> : vector<1xf32>
    %86 = vector.multi_reduction <add>, %85, %cst_64 [1, 2, 3] : vector<1x2x1x3xf32> to vector<1xf32>
    %87 = vector.shape_cast %86 : vector<1xf32> to vector<1x1x1x1xf32>
    %88 = vector.extract %87[0, 0, 0, 0] : f32 from vector<1x1x1x1xf32>
    %89 = arith.addf %65, %88 : f32
    %c0_65 = arith.constant 0 : index
    %c0_66 = arith.constant 0 : index
    %90 = memref.load %arg19[%c0_65, %c0_66] : memref<1x1xf32, #tpu.memory_space<smem>>
    memref.store %89, %arg19[%c0_65, %c0_66] : memref<1x1xf32, #tpu.memory_space<smem>>
    return
  }
  func.func @transform_0(%arg0: i32) -> (i32, i32, i32) {
    %c0_i32 = arith.constant 0 : i32
    %c0_i32_0 = arith.constant 0 : i32
    %c0_i32_1 = arith.constant 0 : i32
    %c0_i32_2 = arith.constant 0 : i32
    return %c0_i32, %c0_i32_0, %c0_i32_1 : i32, i32, i32
  }
  func.func @transform_1(%arg0: i32) -> (i32, i32) {
    %c0_i32 = arith.constant 0 : i32
    %c0_i32_0 = arith.constant 0 : i32
    %c0_i32_1 = arith.constant 0 : i32
    return %c0_i32, %c0_i32_0 : i32, i32
  }
  func.func @transform_2(%arg0: i32) -> (i32, i32) {
    %c0_i32 = arith.constant 0 : i32
    %c0_i32_0 = arith.constant 0 : i32
    %c0_i32_1 = arith.constant 0 : i32
    return %c0_i32, %c0_i32_0 : i32, i32
  }
  func.func @transform_3(%arg0: i32) -> (i32, i32) {
    %c0_i32 = arith.constant 0 : i32
    %c0_i32_0 = arith.constant 0 : i32
    %c0_i32_1 = arith.constant 0 : i32
    return %c0_i32, %c0_i32_0 : i32, i32
  }
  func.func @transform_4(%arg0: i32) -> (i32, i32) {
    %c0_i32 = arith.constant 0 : i32
    %c0_i32_0 = arith.constant 0 : i32
    %c0_i32_1 = arith.constant 0 : i32
    return %c0_i32, %c0_i32_0 : i32, i32
  }
  func.func @transform_5(%arg0: i32) -> (i32, i32) {
    %c0_i32 = arith.constant 0 : i32
    %c0_i32_0 = arith.constant 0 : i32
    %c0_i32_1 = arith.constant 0 : i32
    return %c0_i32, %c0_i32_0 : i32, i32
  }
  func.func @transform_6(%arg0: i32) -> (i32, i32, i32) {
    %c0_i32 = arith.constant 0 : i32
    %c0_i32_0 = arith.constant 0 : i32
    %c0_i32_1 = arith.constant 0 : i32
    %c0_i32_2 = arith.constant 0 : i32
    return %c0_i32, %c0_i32_0, %c0_i32_1 : i32, i32, i32
  }
  func.func @transform_7(%arg0: i32) -> (i32, i32, i32) {
    %c0_i32 = arith.constant 0 : i32
    %c0_i32_0 = arith.constant 0 : i32
    %c0_i32_1 = arith.constant 0 : i32
    %c0_i32_2 = arith.constant 0 : i32
    return %c0_i32, %c0_i32_0, %c0_i32_1 : i32, i32, i32
  }
  func.func @transform_8(%arg0: i32) -> (i32, i32, i32) {
    %c0_i32 = arith.constant 0 : i32
    %c0_i32_0 = arith.constant 0 : i32
    %c0_i32_1 = arith.constant 0 : i32
    %c0_i32_2 = arith.constant 0 : i32
    return %c0_i32, %c0_i32_0, %c0_i32_1 : i32, i32, i32
  }
  func.func @transform_9(%arg0: i32) -> (i32, i32, i32) {
    %c0_i32 = arith.constant 0 : i32
    %c0_i32_0 = arith.constant 0 : i32
    %c0_i32_1 = arith.constant 0 : i32
    %c0_i32_2 = arith.constant 0 : i32
    return %c0_i32, %c0_i32_0, %c0_i32_1 : i32, i32, i32
  }
  func.func @transform_10(%arg0: i32) -> (i32, i32, i32) {
    %c0_i32 = arith.constant 0 : i32
    %c0_i32_0 = arith.constant 0 : i32
    %c0_i32_1 = arith.constant 0 : i32
    %c0_i32_2 = arith.constant 0 : i32
    return %c0_i32, %c0_i32_0, %c0_i32_1 : i32, i32, i32
  }
  func.func @transform_11(%arg0: i32) -> (i32, i32, i32) {
    %c0_i32 = arith.constant 0 : i32
    %c0_i32_0 = arith.constant 0 : i32
    %c0_i32_1 = arith.constant 0 : i32
    %c0_i32_2 = arith.constant 0 : i32
    return %c0_i32, %c0_i32_0, %c0_i32_1 : i32, i32, i32
  }
  func.func @transform_12(%arg0: i32) -> (i32, i32, i32) {
    %c0_i32 = arith.constant 0 : i32
    %c0_i32_0 = arith.constant 0 : i32
    %c0_i32_1 = arith.constant 0 : i32
    %c0_i32_2 = arith.constant 0 : i32
    return %c0_i32, %c0_i32_0, %c0_i32_1 : i32, i32, i32
  }
  func.func @transform_13(%arg0: i32) -> (i32, i32, i32) {
    %c0_i32 = arith.constant 0 : i32
    %c0_i32_0 = arith.constant 0 : i32
    %c0_i32_1 = arith.constant 0 : i32
    %c0_i32_2 = arith.constant 0 : i32
    return %c0_i32, %c0_i32_0, %c0_i32_1 : i32, i32, i32
  }
  func.func @transform_14(%arg0: i32) -> (i32, i32, i32) {
    %c0_i32 = arith.constant 0 : i32
    %c0_i32_0 = arith.constant 0 : i32
    %c0_i32_1 = arith.constant 0 : i32
    %c0_i32_2 = arith.constant 0 : i32
    return %c0_i32, %c0_i32_0, %c0_i32_1 : i32, i32, i32
  }
  func.func @transform_15(%arg0: i32) -> (i32, i32, i32) {
    %c0_i32 = arith.constant 0 : i32
    %c0_i32_0 = arith.constant 0 : i32
    %c0_i32_1 = arith.constant 0 : i32
    %c0_i32_2 = arith.constant 0 : i32
    return %c0_i32, %c0_i32_0, %c0_i32_1 : i32, i32, i32
  }
  func.func @transform_16(%arg0: i32) -> (i32, i32, i32) {
    %c0_i32 = arith.constant 0 : i32
    %c0_i32_0 = arith.constant 0 : i32
    %c0_i32_1 = arith.constant 0 : i32
    %c0_i32_2 = arith.constant 0 : i32
    return %c0_i32, %c0_i32_0, %c0_i32_1 : i32, i32, i32
  }
  func.func @transform_17(%arg0: i32) -> (i32, i32, i32) {
    %c0_i32 = arith.constant 0 : i32
    %c0_i32_0 = arith.constant 0 : i32
    %c0_i32_1 = arith.constant 0 : i32
    %c0_i32_2 = arith.constant 0 : i32
    return %c0_i32, %c0_i32_0, %c0_i32_1 : i32, i32, i32
  }
  func.func @transform_18(%arg0: i32) -> (i32, i32) {
    %c0_i32 = arith.constant 0 : i32
    %c0_i32_0 = arith.constant 0 : i32
    %c0_i32_1 = arith.constant 0 : i32
    return %c0_i32, %c0_i32_0 : i32, i32
  }
}

</mosaic_0001>

<llo_original>
// kernel: tpu_custom_call.1
$region0: #{tpu_custom_call.1}
  #allocation0 [shape = 'u32[]', space=smem, size = 0x4, offset = 0x4, fixed_abs, tag = 'smem constant byte address 0x4 - core index']
  #allocation1 [shape = 'u32[144,128]{1,0:T(1,128)}', space=vmem, size = 0x12000, scoped, tag = 'internal scratch']
  %s0 = inlined_call_operand.vmem [shape: f32[2,5,32], index: 0, kind: input, shape index: {}]
  %s1 = inlined_call_operand.vmem [shape: f32[2,1], index: 1, kind: input, shape index: {}]
  %s2 = inlined_call_operand.vmem [shape: f32[32,32], index: 2, kind: input, shape index: {}]
  %s3 = inlined_call_operand.vmem [shape: f32[1,32], index: 3, kind: input, shape index: {}]
  %s4 = inlined_call_operand.vmem [shape: f32[2,32], index: 4, kind: input, shape index: {}]
  %s5 = inlined_call_operand.vmem [shape: f32[2,32], index: 5, kind: input, shape index: {}]
  %s6 = inlined_call_operand.vmem [shape: f32[2,18,32], index: 6, kind: input, shape index: {}]
  %s7 = inlined_call_operand.vmem [shape: f32[2,1,18], index: 7, kind: input, shape index: {}]
  %s8 = inlined_call_operand.vmem [shape: f32[2,1,18], index: 8, kind: input, shape index: {}]
  %s9 = inlined_call_operand.vmem [shape: f32[2,1,18], index: 9, kind: input, shape index: {}]
  %s10 = inlined_call_operand.vmem [shape: f32[2,18,32], index: 10, kind: input, shape index: {}]
  %s11 = inlined_call_operand.vmem [shape: f32[2,1,18], index: 11, kind: input, shape index: {}]
  %s12 = inlined_call_operand.vmem [shape: f32[2,1,18], index: 12, kind: input, shape index: {}]
  %s13 = inlined_call_operand.vmem [shape: f32[2,1,18], index: 13, kind: input, shape index: {}]
  %s14 = inlined_call_operand.vmem [shape: f32[2,3,32], index: 14, kind: input, shape index: {}]
  %s15 = inlined_call_operand.vmem [shape: f32[2,1,3], index: 15, kind: input, shape index: {}]
  %s16 = inlined_call_operand.vmem [shape: f32[2,1,3], index: 16, kind: input, shape index: {}]
  %s17 = inlined_call_operand.vmem [shape: f32[2,1,3], index: 17, kind: input, shape index: {}]
  %s18 = inlined_call_operand.hbm [shape: f32[1,1], index: 18, kind: output, shape index: {}]
  %s19 = sld [smem:[#allocation0]]
  $region82: #{tpu_custom_call.1} parent=0
    _
  %s21 = ssub.s32 1, %s19
  %s22 = scalar_select 0, %s21, %s19
  $region1: #{tpu_custom_call.1} parent=0
    #allocation2 [shape = 'u8[512]{0}', space=smem, size = 0x200, scoped, tag = 'output window, operand 0, single buffered']
    #allocation3 [shape = 's32[1]{0}', space=sflag, size = 0x4, scoped, tag = 'scoped memory for tpu_custom_call.1']
    %23 = vsyncpa [#allocation3], 0
    // Predicated region
    $region2: #{tpu_custom_call.1} parent=1 // pred_check
      _
    $region3: #{tpu_custom_call.1} parent=1 // pred_check_branch
      %25 = sbr.rel (0) target = $region5
    $region4: #{tpu_custom_call.1} parent=1 // pred_region
      _
    $region5: #{tpu_custom_call.1} parent=1 // pred_fallthru
      _
    // Predicated region
    $region6: #{tpu_custom_call.1} parent=1 // pred_check
      _
    $region7: #{tpu_custom_call.1} parent=1 // pred_check_branch
      %27 = sbr.rel (0) target = $region9
    $region8: #{tpu_custom_call.1} parent=1 // pred_region
      _
    $region9: #{tpu_custom_call.1} parent=1 // pred_fallthru
      _
    // Predicated region
    $region10: #{tpu_custom_call.1} parent=1 // pred_check
      _
    $region11: #{tpu_custom_call.1} parent=1 // pred_check_branch
      %29 = sbr.rel (0) target = $region13
    $region12: #{tpu_custom_call.1} parent=1 // pred_region
      _
    $region13: #{tpu_custom_call.1} parent=1 // pred_fallthru
      _
    // Predicated region
    $region14: #{tpu_custom_call.1} parent=1 // pred_check
      _
    $region15: #{tpu_custom_call.1} parent=1 // pred_check_branch
      %31 = sbr.rel (0) target = $region17
    $region16: #{tpu_custom_call.1} parent=1 // pred_region
      _
    $region17: #{tpu_custom_call.1} parent=1 // pred_fallthru
      _
    // Predicated region
    $region18: #{tpu_custom_call.1} parent=1 // pred_check
      _
    $region19: #{tpu_custom_call.1} parent=1 // pred_check_branch
      %33 = sbr.rel (0) target = $region21
    $region20: #{tpu_custom_call.1} parent=1 // pred_region
      _
    $region21: #{tpu_custom_call.1} parent=1 // pred_fallthru
      _
    // Predicated region
    $region22: #{tpu_custom_call.1} parent=1 // pred_check
      _
    $region23: #{tpu_custom_call.1} parent=1 // pred_check_branch
      %35 = sbr.rel (0) target = $region25
    $region24: #{tpu_custom_call.1} parent=1 // pred_region
      _
    $region25: #{tpu_custom_call.1} parent=1 // pred_fallthru
      _
    // Predicated region
    $region26: #{tpu_custom_call.1} parent=1 // pred_check
      _
    $region27: #{tpu_custom_call.1} parent=1 // pred_check_branch
      %37 = sbr.rel (0) target = $region29
    $region28: #{tpu_custom_call.1} parent=1 // pred_region
      _
    $region29: #{tpu_custom_call.1} parent=1 // pred_fallthru
      _
    // Predicated region
    $region30: #{tpu_custom_call.1} parent=1 // pred_check
      _
    $region31: #{tpu_custom_call.1} parent=1 // pred_check_branch
      %39 = sbr.rel (0) target = $region33
    $region32: #{tpu_custom_call.1} parent=1 // pred_region
      _
    $region33: #{tpu_custom_call.1} parent=1 // pred_fallthru
      _
    // Predicated region
    $region34: #{tpu_custom_call.1} parent=1 // pred_check
      _
    $region35: #{tpu_custom_call.1} parent=1 // pred_check_branch
      %41 = sbr.rel (0) target = $region37
    $region36: #{tpu_custom_call.1} parent=1 // pred_region
      _
    $region37: #{tpu_custom_call.1} parent=1 // pred_fallthru
      _
    // Predicated region
    $region38: #{tpu_custom_call.1} parent=1 // pred_check
      _
    $region39: #{tpu_custom_call.1} parent=1 // pred_check_branch
      %43 = sbr.rel (0) target = $region41
    $region40: #{tpu_custom_call.1} parent=1 // pred_region
      _
    $region41: #{tpu_custom_call.1} parent=1 // pred_fallthru
      _
    // Predicated region
    $region42: #{tpu_custom_call.1} parent=1 // pred_check
      _
    $region43: #{tpu_custom_call.1} parent=1 // pred_check_branch
      %45 = sbr.rel (0) target = $region45
    $region44: #{tpu_custom_call.1} parent=1 // pred_region
      _
    $region45: #{tpu_custom_call.1} parent=1 // pred_fallthru
      _
    // Predicated region
    $region46: #{tpu_custom_call.1} parent=1 // pred_check
      _
    $region47: #{tpu_custom_call.1} parent=1 // pred_check_branch
      %47 = sbr.rel (0) target = $region49
    $region48: #{tpu_custom_call.1} parent=1 // pred_region
      _
    $region49: #{tpu_custom_call.1} parent=1 // pred_fallthru
      _
    // Predicated region
    $region50: #{tpu_custom_call.1} parent=1 // pred_check
      _
    $region51: #{tpu_custom_call.1} parent=1 // pred_check_branch
      %49 = sbr.rel (0) target = $region53
    $region52: #{tpu_custom_call.1} parent=1 // pred_region
      _
    $region53: #{tpu_custom_call.1} parent=1 // pred_fallthru
      _
    // Predicated region
    $region54: #{tpu_custom_call.1} parent=1 // pred_check
      _
    $region55: #{tpu_custom_call.1} parent=1 // pred_check_branch
      %51 = sbr.rel (0) target = $region57
    $region56: #{tpu_custom_call.1} parent=1 // pred_region
      _
    $region57: #{tpu_custom_call.1} parent=1 // pred_fallthru
      _
    // Predicated region
    $region58: #{tpu_custom_call.1} parent=1 // pred_check
      _
    $region59: #{tpu_custom_call.1} parent=1 // pred_check_branch
      %53 = sbr.rel (0) target = $region61
    $region60: #{tpu_custom_call.1} parent=1 // pred_region
      _
    $region61: #{tpu_custom_call.1} parent=1 // pred_fallthru
      _
    // Predicated region
    $region62: #{tpu_custom_call.1} parent=1 // pred_check
      _
    $region63: #{tpu_custom_call.1} parent=1 // pred_check_branch
      %55 = sbr.rel (0) target = $region65
    $region64: #{tpu_custom_call.1} parent=1 // pred_region
      _
    $region65: #{tpu_custom_call.1} parent=1 // pred_fallthru
      _
    // Predicated region
    $region66: #{tpu_custom_call.1} parent=1 // pred_check
      _
    $region67: #{tpu_custom_call.1} parent=1 // pred_check_branch
      %57 = sbr.rel (0) target = $region69
    $region68: #{tpu_custom_call.1} parent=1 // pred_region
      _
    $region69: #{tpu_custom_call.1} parent=1 // pred_fallthru
      _
    // Predicated region
    $region70: #{tpu_custom_call.1} parent=1 // pred_check
      _
    $region71: #{tpu_custom_call.1} parent=1 // pred_check_branch
      %59 = sbr.rel (0) target = $region73
    $region72: #{tpu_custom_call.1} parent=1 // pred_region
      _
    $region73: #{tpu_custom_call.1} parent=1 // pred_fallthru
      _
    %v60 = vld [vmem:[%s0] sm:$0x1f]
    %v61 = vld [vmem:[%s0 + $0x8] sm:$0x1f]
    %vm62 = vcmask 258048
    %v63 = vsel %vm62, %v60, 0.0
    %v64 = vrot.slane %v63, 4
    %v65 = vadd.f32 %v63, %v64
    %v66 = vrot.slane %v65, 2
    %v67 = vadd.f32 %v65, %v66
    %v68 = vrot.slane %v67, 1
    %v69 = vadd.f32 %v67, %v68
    %v70 = vsel %vm62, %v61, 0.0
    %v71 = vrot.slane %v70, 4
    %v72 = vadd.f32 %v70, %v71
    %v73 = vrot.slane %v72, 2
    %v74 = vadd.f32 %v72, %v73
    %v75 = vrot.slane %v74, 1
    %v76 = vadd.f32 %v74, %v75
    %v77 = vld [vmem:[%s1] sm:$0x3]
    %79 = vset.pattern.permute.xlu0 0
    %80 = vperm.xlu0 %79, %v77
    %v81 = vpop.permute.xlu0 %80
    %v82 = vrot.slane %v81, 1
    %v85 = vmul.f32 %v69, %v81
    %v86 = vmul.f32 %v76, %v82
    %v87 = vld [vmem:[%s2] sm:$0xff]
    %v88 = vld [vmem:[%s2 + $0x8] sm:$0xff]
    %v89 = vld [vmem:[%s2 + $0x10] sm:$0xff]
    %v90 = vld [vmem:[%s2 + $0x18] sm:$0xff]
    %v91 = vld [vmem:[%s3] sm:$0x1]
    %v93 = vlaneseq
    %v94 = vshrl.u32 %v93, 7
    %v95 = vsub.s32 0, %v94
    %v96 = vrot.slane %v91, %v95
    %v100 = vrot.slane %v86, 7
    %vm101 = vcmask 1041409
    %v102 = vsel %vm101, %v100, %v85
    %vm103 = vcmask 261120
    %v104 = vsel %vm103, %v102, 0
    %106 = vmatprep.subr.mxu0 0.0
    %107 = vmatpush1.msra.mxu0 %v87
    %108 = vmatprep.subr.mxu0 0.0
    %109 = vmatpush1.msra.mxu0 %v88
    %110 = vmatprep.subr.mxu0 0.0
    %111 = vmatpush1.msra.mxu0 %v89
    %112 = vmatprep.subr.mxu0 0.0
    %113 = vmatpush1.msra.mxu0 %v90
    %114 = vmatprep.subr.mxu0 0.0
    %115 = vmatpush1.msra.mxu0 0.0
    %116 = vmatprep.subr.mxu0 0.0
    %117 = vmatpush1.msra.mxu0 0.0
    %118 = vmatprep.subr.mxu0 0.0
    %119 = vmatpush1.msra.mxu0 0.0
    %120 = vmatprep.subr.mxu0 0.0
    %121 = vmatpush1.msra.mxu0 0.0
    %122 = vmatprep.subr.mxu0 0.0
    %123 = vmatpush1.msra.mxu0 0.0
    %124 = vmatprep.subr.mxu0 0.0
    %125 = vmatpush1.msra.mxu0 0.0
    %126 = vmatprep.subr.mxu0 0.0
    %127 = vmatpush1.msra.mxu0 0.0
    %128 = vmatprep.subr.mxu0 0.0
    %129 = vmatpush1.msra.mxu0 0.0
    %130 = vmatprep.subr.mxu0 0.0
    %131 = vmatpush1.msra.mxu0 0.0
    %132 = vmatprep.subr.mxu0 0.0
    %133 = vmatpush1.msra.mxu0 0.0
    %134 = vmatprep.subr.mxu0 0.0
    %135 = vmatpush1.msra.mxu0 0.0
    %136 = vmatprep.subr.mxu0 0.0
    %137 = vmatpush1.msra.mxu0 0.0
    %138 = vmatprep.subr.mxu0 0.0
    %139 = vmatpush1.msra.mxu0 0.0
    %140 = vmatprep.subr.mxu0 0.0
    %141 = vmatpush1.msra.mxu0 0.0
    %142 = vmatprep.subr.mxu0 0.0
    %143 = vmatpush1.msra.mxu0 0.0
    %144 = vmatprep.subr.mxu0 0.0
    %145 = vmatpush1.msra.mxu0 0.0
    %146 = vmatprep.subr.mxu0 0.0
    %147 = vmatpush1.msra.mxu0 0.0
    %148 = vmatprep.subr.mxu0 0.0
    %149 = vmatpush1.msra.mxu0 0.0
    %150 = vmatprep.subr.mxu0 0.0
    %151 = vmatpush1.msra.mxu0 0.0
    %152 = vmatprep.subr.mxu0 0.0
    %153 = vmatpush1.msra.mxu0 0.0
    %154 = vmatprep.subr.mxu0 0.0
    %155 = vmatpush1.msra.mxu0 0.0
    %156 = vmatprep.subr.mxu0 0.0
    %157 = vmatpush1.msra.mxu0 0.0
    %158 = vmatprep.subr.mxu0 0.0
    %159 = vmatpush1.msra.mxu0 0.0
    %160 = vmatprep.subr.mxu0 0.0
    %161 = vmatpush1.msra.mxu0 0.0
    %162 = vmatprep.subr.mxu0 0.0
    %163 = vmatpush1.msra.mxu0 0.0
    %164 = vmatprep.subr.mxu0 0.0
    %165 = vmatpush1.msra.mxu0 0.0
    %166 = vmatprep.subr.mxu0 0.0
    %167 = vmatpush1.msra.mxu0 0.0
    %168 = vmatprep.subr.mxu0 0.0
    %169 = vmatpush1.msra.mxu0 0.0
    %170 = vmatprep.mubr.f32.mxu0 0.0
    %171 = vmatmul.mubr.f32.gmra.mrb[0].mxu0 %v104
    %v172 = vpop.f32.mrb[0].mxu0
    %v173 = vadd.f32 %v96, %v172
    %v174 = vpop.f32.mrb[0].mxu0
    %175 = vdwg.mxu0
    %v176 = vtanh.pop %v173
    %v177 = vmul.f32 %v176, 0.5
    %v178 = vld [vmem:[%s4] sm:$0x3]
    %v179 = vmul.f32 %v178, 0.5
    %v180 = vadd.f32 %v177, %v179
    %v181 = vld [vmem:[%s6] sm:$0xff]
    %v182 = vld [vmem:[%s6 + $0x8] sm:$0xff]
    %v183 = vld [vmem:[%s6 + $0x10] sm:$0x3]
    %v184 = vld [vmem:[%s6 + $0x18] sm:$0xff]
    %v185 = vld [vmem:[%s6 + $0x20] sm:$0xff]
    %v186 = vld [vmem:[%s6 + $0x28] sm:$0x3]
    %v187 = vld [vmem:[%s7] sm:$0x1]
    %v188 = vld [vmem:[%s7 + $0x1] sm:$0x1]
    %v189 = vld [vmem:[%s8] sm:$0x1]
    %v190 = vld [vmem:[%s8 + $0x1] sm:$0x1]
    %v191 = vld [vmem:[%s9] sm:$0x1]
    %v192 = vld [vmem:[%s9 + $0x1] sm:$0x1]
    %v195 = vunpack.c.l.s4 1966171168
    %v196 = vunpack.c.0.s8 %v195
    %v197 = vlaneseq
    %v198 = vshrl.u32 %v197, 7
    %v199 = vsub.s32 %v196, %v198
    %v200 = vrot.slane %v178, %v199
    %v201 = vcombine.high %v200, %v200
    %v203 = vunpack.c.l.s4 1966171168
    %v204 = vunpack.c.0.s8 %v203
    %v205 = vlaneseq
    %v206 = vshrl.u32 %v205, 7
    %v207 = vsub.s32 %v204, %v206
    %v208 = vrot.slane %v200, %v207
    %v210 = vunpack.c.l.s4 1966171168
    %v211 = vunpack.c.0.s8 %v210
    %v212 = vlaneseq
    %v213 = vshrl.u32 %v212, 7
    %v214 = vsub.s32 %v211, %v213
    %v215 = vrot.slane %v201, %v214
    %v216 = vsel %vm103, %v208, 0
    %v219 = vsel %vm103, %v181, 0
    %v222 = vsel %vm103, %v182, 0
    %v225 = vsel %vm103, %v183, 0
    %227 = vmatprep.subr.mxu0 0.0
    %228 = vmatpush1.xpose.msra.mxu0 %v219
    %229 = vmatprep.subr.mxu0 0.0
    %230 = vmatpush1.xpose.msra.mxu0 %v222
    %231 = vmatprep.subr.mxu0 0.0
    %232 = vmatpush1.xpose.msra.mxu0 %v225
    %233 = vmatprep.subr.mxu0 0.0
    %234 = vmatpush1.xpose.msra.mxu0 0.0
    %235 = vmatprep.subr.mxu0 0.0
    %236 = vmatpush1.xpose.msra.mxu0 0.0
    %237 = vmatprep.subr.mxu0 0.0
    %238 = vmatpush1.xpose.msra.mxu0 0.0
    %239 = vmatprep.subr.mxu0 0.0
    %240 = vmatpush1.xpose.msra.mxu0 0.0
    %241 = vmatprep.subr.mxu0 0.0
    %242 = vmatpush1.xpose.msra.mxu0 0.0
    %243 = vmatprep.subr.mxu0 0.0
    %244 = vmatpush1.xpose.msra.mxu0 0.0
    %245 = vmatprep.subr.mxu0 0.0
    %246 = vmatpush1.xpose.msra.mxu0 0.0
    %247 = vmatprep.subr.mxu0 0.0
    %248 = vmatpush1.xpose.msra.mxu0 0.0
    %249 = vmatprep.subr.mxu0 0.0
    %250 = vmatpush1.xpose.msra.mxu0 0.0
    %251 = vmatprep.subr.mxu0 0.0
    %252 = vmatpush1.xpose.msra.mxu0 0.0
    %253 = vmatprep.subr.mxu0 0.0
    %254 = vmatpush1.xpose.msra.mxu0 0.0
    %255 = vmatprep.subr.mxu0 0.0
    %256 = vmatpush1.xpose.msra.mxu0 0.0
    %257 = vmatprep.subr.mxu0 0.0
    %258 = vmatpush1.xpose.msra.mxu0 0.0
    %259 = vmatprep.subr.mxu0 0.0
    %260 = vmatpush1.xpose.msra.mxu0 0.0
    %261 = vmatprep.subr.mxu0 0.0
    %262 = vmatpush1.xpose.msra.mxu0 0.0
    %263 = vmatprep.subr.mxu0 0.0
    %264 = vmatpush1.xpose.msra.mxu0 0.0
    %265 = vmatprep.subr.mxu0 0.0
    %266 = vmatpush1.xpose.msra.mxu0 0.0
    %267 = vmatprep.subr.mxu0 0.0
    %268 = vmatpush1.xpose.msra.mxu0 0.0
    %269 = vmatprep.subr.mxu0 0.0
    %270 = vmatpush1.xpose.msra.mxu0 0.0
    %271 = vmatprep.subr.mxu0 0.0
    %272 = vmatpush1.xpose.msra.mxu0 0.0
    %273 = vmatprep.subr.mxu0 0.0
    %274 = vmatpush1.xpose.msra.mxu0 0.0
    %275 = vmatprep.subr.mxu0 0.0
    %276 = vmatpush1.xpose.msra.mxu0 0.0
    %277 = vmatprep.subr.mxu0 0.0
    %278 = vmatpush1.xpose.msra.mxu0 0.0
    %279 = vmatprep.subr.mxu0 0.0
    %280 = vmatpush1.xpose.msra.mxu0 0.0
    %281 = vmatprep.subr.mxu0 0.0
    %282 = vmatpush1.xpose.msra.mxu0 0.0
    %283 = vmatprep.subr.mxu0 0.0
    %284 = vmatpush1.xpose.msra.mxu0 0.0
    %285 = vmatprep.subr.mxu0 0.0
    %286 = vmatpush1.xpose.msra.mxu0 0.0
    %287 = vmatprep.subr.mxu0 0.0
    %288 = vmatpush1.xpose.msra.mxu0 0.0
    %289 = vmatprep.subr.mxu0 0.0
    %290 = vmatpush1.xpose.msra.mxu0 0.0
    %291 = vmatprep.mubr.f32.mxu0 0.0
    %292 = vmatmul.mubr.f32.gmra.mrb[0].mxu0 %v216
    %v293 = vpop.f32.mrb[0].mxu0
    %v294 = vadd.f32 %v187, %v293
    %v295 = vpop.f32.mrb[0].mxu0
    %296 = vdwg.mxu0
    %v297 = vsel %vm103, %v215, 0
    %v300 = vsel %vm103, %v184, 0
    %v303 = vsel %vm103, %v185, 0
    %v306 = vsel %vm103, %v186, 0
    %308 = vmatprep.subr.mxu0 0.0
    %309 = vmatpush1.xpose.msra.mxu0 %v300
    %310 = vmatprep.subr.mxu0 0.0
    %311 = vmatpush1.xpose.msra.mxu0 %v303
    %312 = vmatprep.subr.mxu0 0.0
    %313 = vmatpush1.xpose.msra.mxu0 %v306
    %314 = vmatprep.subr.mxu0 0.0
    %315 = vmatpush1.xpose.msra.mxu0 0.0
    %316 = vmatprep.subr.mxu0 0.0
    %317 = vmatpush1.xpose.msra.mxu0 0.0
    %318 = vmatprep.subr.mxu0 0.0
    %319 = vmatpush1.xpose.msra.mxu0 0.0
    %320 = vmatprep.subr.mxu0 0.0
    %321 = vmatpush1.xpose.msra.mxu0 0.0
    %322 = vmatprep.subr.mxu0 0.0
    %323 = vmatpush1.xpose.msra.mxu0 0.0
    %324 = vmatprep.subr.mxu0 0.0
    %325 = vmatpush1.xpose.msra.mxu0 0.0
    %326 = vmatprep.subr.mxu0 0.0
    %327 = vmatpush1.xpose.msra.mxu0 0.0
    %328 = vmatprep.subr.mxu0 0.0
    %329 = vmatpush1.xpose.msra.mxu0 0.0
    %330 = vmatprep.subr.mxu0 0.0
    %331 = vmatpush1.xpose.msra.mxu0 0.0
    %332 = vmatprep.subr.mxu0 0.0
    %333 = vmatpush1.xpose.msra.mxu0 0.0
    %334 = vmatprep.subr.mxu0 0.0
    %335 = vmatpush1.xpose.msra.mxu0 0.0
    %336 = vmatprep.subr.mxu0 0.0
    %337 = vmatpush1.xpose.msra.mxu0 0.0
    %338 = vmatprep.subr.mxu0 0.0
    %339 = vmatpush1.xpose.msra.mxu0 0.0
    %340 = vmatprep.subr.mxu0 0.0
    %341 = vmatpush1.xpose.msra.mxu0 0.0
    %342 = vmatprep.subr.mxu0 0.0
    %343 = vmatpush1.xpose.msra.mxu0 0.0
    %344 = vmatprep.subr.mxu0 0.0
    %345 = vmatpush1.xpose.msra.mxu0 0.0
    %346 = vmatprep.subr.mxu0 0.0
    %347 = vmatpush1.xpose.msra.mxu0 0.0
    %348 = vmatprep.subr.mxu0 0.0
    %349 = vmatpush1.xpose.msra.mxu0 0.0
    %350 = vmatprep.subr.mxu0 0.0
    %351 = vmatpush1.xpose.msra.mxu0 0.0
    %352 = vmatprep.subr.mxu0 0.0
    %353 = vmatpush1.xpose.msra.mxu0 0.0
    %354 = vmatprep.subr.mxu0 0.0
    %355 = vmatpush1.xpose.msra.mxu0 0.0
    %356 = vmatprep.subr.mxu0 0.0
    %357 = vmatpush1.xpose.msra.mxu0 0.0
    %358 = vmatprep.subr.mxu0 0.0
    %359 = vmatpush1.xpose.msra.mxu0 0.0
    %360 = vmatprep.subr.mxu0 0.0
    %361 = vmatpush1.xpose.msra.mxu0 0.0
    %362 = vmatprep.subr.mxu0 0.0
    %363 = vmatpush1.xpose.msra.mxu0 0.0
    %364 = vmatprep.subr.mxu0 0.0
    %365 = vmatpush1.xpose.msra.mxu0 0.0
    %366 = vmatprep.subr.mxu0 0.0
    %367 = vmatpush1.xpose.msra.mxu0 0.0
    %368 = vmatprep.subr.mxu0 0.0
    %369 = vmatpush1.xpose.msra.mxu0 0.0
    %370 = vmatprep.subr.mxu0 0.0
    %371 = vmatpush1.xpose.msra.mxu0 0.0
    %372 = vmatprep.mubr.f32.mxu0 0.0
    %373 = vmatmul.mubr.f32.gmra.mrb[0].mxu0 %v297
    %v374 = vpop.f32.mrb[0].mxu0
    %v375 = vadd.f32 %v188, %v374
    %v376 = vpop.f32.mrb[0].mxu0
    %377 = vdwg.mxu0
    %v378 = vmax.f32 %v294, 0.0
    %v379 = vmax.f32 %v375, 0.0
    %v380 = vmul.f32 %v189, %v378
    %v381 = vmul.f32 %v190, %v379
    %v382 = vmul.f32 %v191, %v294
    %v383 = vmul.f32 %v192, %v375
    %v384 = vsub.f32 %v380, %v382
    %v385 = vsub.f32 %v381, %v383
    %v386 = vand.u32 2147483647, %v294
    %v387 = vand.u32 2147483647, %v375
    %v388 = vsub.f32 0.0, %v386
    %v389 = vsub.f32 0.0, %v387
    %v390 = vmul.f32 %v388, 1.442695
    %v391 = vpow.pop %v390
    %v392 = vmul.f32 %v389, 1.442695
    %v393 = vpow.pop %v392
    %v394 = vadd.f32 %v391, 1.0
    %v395 = vlog2.pop %v394
    %v396 = vmul.f32 %v395, 0.6931472
    %v397 = vmul.f32 -0.5, %v391
    %v398 = vadd.f32 %v397, 1.0
    %v399 = vmul.f32 %v398, %v391
    %v400 = vand.u32 2147483647, %v391
    %vm401 = vcmp.lt.f32.partialorder %v400, 0.0004427343
    %v402 = vsel %vm401, %v399, %v396
    %v403 = vadd.f32 %v393, 1.0
    %v404 = vlog2.pop %v403
    %v405 = vmul.f32 %v404, 0.6931472
    %v406 = vmul.f32 -0.5, %v393
    %v407 = vadd.f32 %v406, 1.0
    %v408 = vmul.f32 %v407, %v393
    %v409 = vand.u32 2147483647, %v393
    %vm410 = vcmp.lt.f32.partialorder %v409, 0.0004427343
    %v411 = vsel %vm410, %v408, %v405
    %v412 = vmul.f32 %v189, %v402
    %v413 = vmul.f32 %v190, %v411
    %v414 = vadd.f32 %v384, %v412
    %v415 = vadd.f32 %v385, %v413
    %vm416 = vcmask 139264
    %v417 = vsel %vm416, %v414, 0.0
    %v418 = vsel %vm416, %v415, 0.0
    %v419 = vadd.f32 %v417, %v418
    %420 = vadd.xlane.f32.xlu0 %v419
    %v421 = vpop.xlane.xlu0 %420
    %v422 = vrot.slane %v421, 4
    %v423 = vadd.f32 %v421, %v422
    %v424 = vrot.slane %v423, 2
    %v425 = vadd.f32 %v423, %v424
    %v426 = vrot.slane %v425, 1
    %v427 = vadd.f32 %v425, %v426
    %s428 = vtos %v427
    %v429 = vld [vmem:[%s5] sm:$0x3]
    %v430 = vld [vmem:[%s10] sm:$0xff]
    %v431 = vld [vmem:[%s10 + $0x8] sm:$0xff]
    %v432 = vld [vmem:[%s10 + $0x10] sm:$0x3]
    %v433 = vld [vmem:[%s10 + $0x18] sm:$0xff]
    %v434 = vld [vmem:[%s10 + $0x20] sm:$0xff]
    %v435 = vld [vmem:[%s10 + $0x28] sm:$0x3]
    %v436 = vld [vmem:[%s11] sm:$0x1]
    %v437 = vld [vmem:[%s11 + $0x1] sm:$0x1]
    %v438 = vld [vmem:[%s12] sm:$0x1]
    %v439 = vld [vmem:[%s12 + $0x1] sm:$0x1]
    %v440 = vld [vmem:[%s13] sm:$0x1]
    %v441 = vld [vmem:[%s13 + $0x1] sm:$0x1]
    %v444 = vunpack.c.l.s4 1966171168
    %v445 = vunpack.c.0.s8 %v444
    %v446 = vlaneseq
    %v447 = vshrl.u32 %v446, 7
    %v448 = vsub.s32 %v445, %v447
    %v449 = vrot.slane %v429, %v448
    %v450 = vcombine.high %v449, %v449
    %v452 = vunpack.c.l.s4 1966171168
    %v453 = vunpack.c.0.s8 %v452
    %v454 = vlaneseq
    %v455 = vshrl.u32 %v454, 7
    %v456 = vsub.s32 %v453, %v455
    %v457 = vrot.slane %v449, %v456
    %v459 = vunpack.c.l.s4 1966171168
    %v460 = vunpack.c.0.s8 %v459
    %v461 = vlaneseq
    %v462 = vshrl.u32 %v461, 7
    %v463 = vsub.s32 %v460, %v462
    %v464 = vrot.slane %v450, %v463
    %v465 = vsel %vm103, %v457, 0
    %v468 = vsel %vm103, %v430, 0
    %v471 = vsel %vm103, %v431, 0
    %v474 = vsel %vm103, %v432, 0
    %476 = vmatprep.subr.mxu0 0.0
    %477 = vmatpush1.xpose.msra.mxu0 %v468
    %478 = vmatprep.subr.mxu0 0.0
    %479 = vmatpush1.xpose.msra.mxu0 %v471
    %480 = vmatprep.subr.mxu0 0.0
    %481 = vmatpush1.xpose.msra.mxu0 %v474
    %482 = vmatprep.subr.mxu0 0.0
    %483 = vmatpush1.xpose.msra.mxu0 0.0
    %484 = vmatprep.subr.mxu0 0.0
    %485 = vmatpush1.xpose.msra.mxu0 0.0
    %486 = vmatprep.subr.mxu0 0.0
    %487 = vmatpush1.xpose.msra.mxu0 0.0
    %488 = vmatprep.subr.mxu0 0.0
    %489 = vmatpush1.xpose.msra.mxu0 0.0
    %490 = vmatprep.subr.mxu0 0.0
    %491 = vmatpush1.xpose.msra.mxu0 0.0
    %492 = vmatprep.subr.mxu0 0.0
    %493 = vmatpush1.xpose.msra.mxu0 0.0
    %494 = vmatprep.subr.mxu0 0.0
    %495 = vmatpush1.xpose.msra.mxu0 0.0
    %496 = vmatprep.subr.mxu0 0.0
    %497 = vmatpush1.xpose.msra.mxu0 0.0
    %498 = vmatprep.subr.mxu0 0.0
    %499 = vmatpush1.xpose.msra.mxu0 0.0
    %500 = vmatprep.subr.mxu0 0.0
    %501 = vmatpush1.xpose.msra.mxu0 0.0
    %502 = vmatprep.subr.mxu0 0.0
    %503 = vmatpush1.xpose.msra.mxu0 0.0
    %504 = vmatprep.subr.mxu0 0.0
    %505 = vmatpush1.xpose.msra.mxu0 0.0
    %506 = vmatprep.subr.mxu0 0.0
    %507 = vmatpush1.xpose.msra.mxu0 0.0
    %508 = vmatprep.subr.mxu0 0.0
    %509 = vmatpush1.xpose.msra.mxu0 0.0
    %510 = vmatprep.subr.mxu0 0.0
    %511 = vmatpush1.xpose.msra.mxu0 0.0
    %512 = vmatprep.subr.mxu0 0.0
    %513 = vmatpush1.xpose.msra.mxu0 0.0
    %514 = vmatprep.subr.mxu0 0.0
    %515 = vmatpush1.xpose.msra.mxu0 0.0
    %516 = vmatprep.subr.mxu0 0.0
    %517 = vmatpush1.xpose.msra.mxu0 0.0
    %518 = vmatprep.subr.mxu0 0.0
    %519 = vmatpush1.xpose.msra.mxu0 0.0
    %520 = vmatprep.subr.mxu0 0.0
    %521 = vmatpush1.xpose.msra.mxu0 0.0
    %522 = vmatprep.subr.mxu0 0.0
    %523 = vmatpush1.xpose.msra.mxu0 0.0
    %524 = vmatprep.subr.mxu0 0.0
    %525 = vmatpush1.xpose.msra.mxu0 0.0
    %526 = vmatprep.subr.mxu0 0.0
    %527 = vmatpush1.xpose.msra.mxu0 0.0
    %528 = vmatprep.subr.mxu0 0.0
    %529 = vmatpush1.xpose.msra.mxu0 0.0
    %530 = vmatprep.subr.mxu0 0.0
    %531 = vmatpush1.xpose.msra.mxu0 0.0
    %532 = vmatprep.subr.mxu0 0.0
    %533 = vmatpush1.xpose.msra.mxu0 0.0
    %534 = vmatprep.subr.mxu0 0.0
    %535 = vmatpush1.xpose.msra.mxu0 0.0
    %536 = vmatprep.subr.mxu0 0.0
    %537 = vmatpush1.xpose.msra.mxu0 0.0
    %538 = vmatprep.subr.mxu0 0.0
    %539 = vmatpush1.xpose.msra.mxu0 0.0
    %540 = vmatprep.mubr.f32.mxu0 0.0
    %541 = vmatmul.mubr.f32.gmra.mrb[0].mxu0 %v465
    %v542 = vpop.f32.mrb[0].mxu0
    %v543 = vadd.f32 %v436, %v542
    %v544 = vpop.f32.mrb[0].mxu0
    %545 = vdwg.mxu0
    %v546 = vsel %vm103, %v464, 0
    %v549 = vsel %vm103, %v433, 0
    %v552 = vsel %vm103, %v434, 0
    %v555 = vsel %vm103, %v435, 0
    %557 = vmatprep.subr.mxu0 0.0
    %558 = vmatpush1.xpose.msra.mxu0 %v549
    %559 = vmatprep.subr.mxu0 0.0
    %560 = vmatpush1.xpose.msra.mxu0 %v552
    %561 = vmatprep.subr.mxu0 0.0
    %562 = vmatpush1.xpose.msra.mxu0 %v555
    %563 = vmatprep.subr.mxu0 0.0
    %564 = vmatpush1.xpose.msra.mxu0 0.0
    %565 = vmatprep.subr.mxu0 0.0
    %566 = vmatpush1.xpose.msra.mxu0 0.0
    %567 = vmatprep.subr.mxu0 0.0
    %568 = vmatpush1.xpose.msra.mxu0 0.0
    %569 = vmatprep.subr.mxu0 0.0
    %570 = vmatpush1.xpose.msra.mxu0 0.0
    %571 = vmatprep.subr.mxu0 0.0
    %572 = vmatpush1.xpose.msra.mxu0 0.0
    %573 = vmatprep.subr.mxu0 0.0
    %574 = vmatpush1.xpose.msra.mxu0 0.0
    %575 = vmatprep.subr.mxu0 0.0
    %576 = vmatpush1.xpose.msra.mxu0 0.0
    %577 = vmatprep.subr.mxu0 0.0
    %578 = vmatpush1.xpose.msra.mxu0 0.0
    %579 = vmatprep.subr.mxu0 0.0
    %580 = vmatpush1.xpose.msra.mxu0 0.0
    %581 = vmatprep.subr.mxu0 0.0
    %582 = vmatpush1.xpose.msra.mxu0 0.0
    %583 = vmatprep.subr.mxu0 0.0
    %584 = vmatpush1.xpose.msra.mxu0 0.0
    %585 = vmatprep.subr.mxu0 0.0
    %586 = vmatpush1.xpose.msra.mxu0 0.0
    %587 = vmatprep.subr.mxu0 0.0
    %588 = vmatpush1.xpose.msra.mxu0 0.0
    %589 = vmatprep.subr.mxu0 0.0
    %590 = vmatpush1.xpose.msra.mxu0 0.0
    %591 = vmatprep.subr.mxu0 0.0
    %592 = vmatpush1.xpose.msra.mxu0 0.0
    %593 = vmatprep.subr.mxu0 0.0
    %594 = vmatpush1.xpose.msra.mxu0 0.0
    %595 = vmatprep.subr.mxu0 0.0
    %596 = vmatpush1.xpose.msra.mxu0 0.0
    %597 = vmatprep.subr.mxu0 0.0
    %598 = vmatpush1.xpose.msra.mxu0 0.0
    %599 = vmatprep.subr.mxu0 0.0
    %600 = vmatpush1.xpose.msra.mxu0 0.0
    %601 = vmatprep.subr.mxu0 0.0
    %602 = vmatpush1.xpose.msra.mxu0 0.0
    %603 = vmatprep.subr.mxu0 0.0
    %604 = vmatpush1.xpose.msra.mxu0 0.0
    %605 = vmatprep.subr.mxu0 0.0
    %606 = vmatpush1.xpose.msra.mxu0 0.0
    %607 = vmatprep.subr.mxu0 0.0
    %608 = vmatpush1.xpose.msra.mxu0 0.0
    %609 = vmatprep.subr.mxu0 0.0
    %610 = vmatpush1.xpose.msra.mxu0 0.0
    %611 = vmatprep.subr.mxu0 0.0
    %612 = vmatpush1.xpose.msra.mxu0 0.0
    %613 = vmatprep.subr.mxu0 0.0
    %614 = vmatpush1.xpose.msra.mxu0 0.0
    %615 = vmatprep.subr.mxu0 0.0
    %616 = vmatpush1.xpose.msra.mxu0 0.0
    %617 = vmatprep.subr.mxu0 0.0
    %618 = vmatpush1.xpose.msra.mxu0 0.0
    %619 = vmatprep.subr.mxu0 0.0
    %620 = vmatpush1.xpose.msra.mxu0 0.0
    %621 = vmatprep.mubr.f32.mxu0 0.0
    %622 = vmatmul.mubr.f32.gmra.mrb[0].mxu0 %v546
    %v623 = vpop.f32.mrb[0].mxu0
    %v624 = vadd.f32 %v437, %v623
    %v625 = vpop.f32.mrb[0].mxu0
    %626 = vdwg.mxu0
    %v627 = vmax.f32 %v543, 0.0
    %v628 = vmax.f32 %v624, 0.0
    %v629 = vmul.f32 %v438, %v627
    %v630 = vmul.f32 %v439, %v628
    %v631 = vmul.f32 %v440, %v543
    %v632 = vmul.f32 %v441, %v624
    %v633 = vsub.f32 %v629, %v631
    %v634 = vsub.f32 %v630, %v632
    %v635 = vand.u32 2147483647, %v543
    %v636 = vand.u32 2147483647, %v624
    %v637 = vsub.f32 0.0, %v635
    %v638 = vsub.f32 0.0, %v636
    %v639 = vmul.f32 %v637, 1.442695
    %v640 = vpow.pop %v639
    %v641 = vmul.f32 %v638, 1.442695
    %v642 = vpow.pop %v641
    %v643 = vadd.f32 %v640, 1.0
    %v644 = vlog2.pop %v643
    %v645 = vmul.f32 %v644, 0.6931472
    %v646 = vmul.f32 -0.5, %v640
    %v647 = vadd.f32 %v646, 1.0
    %v648 = vmul.f32 %v647, %v640
    %v649 = vand.u32 2147483647, %v640
    %vm650 = vcmp.lt.f32.partialorder %v649, 0.0004427343
    %v651 = vsel %vm650, %v648, %v645
    %v652 = vadd.f32 %v642, 1.0
    %v653 = vlog2.pop %v652
    %v654 = vmul.f32 %v653, 0.6931472
    %v655 = vmul.f32 -0.5, %v642
    %v656 = vadd.f32 %v655, 1.0
    %v657 = vmul.f32 %v656, %v642
    %v658 = vand.u32 2147483647, %v642
    %vm659 = vcmp.lt.f32.partialorder %v658, 0.0004427343
    %v660 = vsel %vm659, %v657, %v654
    %v661 = vmul.f32 %v438, %v651
    %v662 = vmul.f32 %v439, %v660
    %v663 = vadd.f32 %v633, %v661
    %v664 = vadd.f32 %v634, %v662
    %v665 = vsel %vm416, %v663, 0.0
    %v666 = vsel %vm416, %v664, 0.0
    %v667 = vadd.f32 %v665, %v666
    %668 = vadd.xlane.f32.xlu0 %v667
    %v669 = vpop.xlane.xlu0 %668
    %v670 = vrot.slane %v669, 4
    %v671 = vadd.f32 %v669, %v670
    %v672 = vrot.slane %v671, 2
    %v673 = vadd.f32 %v671, %v672
    %v674 = vrot.slane %v673, 1
    %v675 = vadd.f32 %v673, %v674
    %s676 = vtos %v675
    %s677 = sadd.f32 %s428, %s676
    %v678 = vld [vmem:[%s14] sm:$0x7]
    %v679 = vld [vmem:[%s14 + $0x4] sm:$0x7]
    %v680 = vld [vmem:[%s15] sm:$0x1]
    %v681 = vld [vmem:[%s15 + $0x1] sm:$0x1]
    %v682 = vld [vmem:[%s16] sm:$0x1]
    %v683 = vld [vmem:[%s16 + $0x1] sm:$0x1]
    %v684 = vld [vmem:[%s17] sm:$0x1]
    %v685 = vld [vmem:[%s17 + $0x1] sm:$0x1]
    %v688 = vunpack.c.l.s4 1966171168
    %v689 = vunpack.c.0.s8 %v688
    %v690 = vlaneseq
    %v691 = vshrl.u32 %v690, 7
    %v692 = vsub.s32 %v689, %v691
    %v693 = vrot.slane %v180, %v692
    %v694 = vcombine.high %v693, %v693
    %v696 = vunpack.c.l.s4 1966171168
    %v697 = vunpack.c.0.s8 %v696
    %v698 = vlaneseq
    %v699 = vshrl.u32 %v698, 7
    %v700 = vsub.s32 %v697, %v699
    %v701 = vrot.slane %v693, %v700
    %v703 = vunpack.c.l.s4 1966171168
    %v704 = vunpack.c.0.s8 %v703
    %v705 = vlaneseq
    %v706 = vshrl.u32 %v705, 7
    %v707 = vsub.s32 %v704, %v706
    %v708 = vrot.slane %v694, %v707
    %v709 = vsel %vm103, %v701, 0
    %v712 = vsel %vm103, %v678, 0
    %714 = vmatprep.subr.mxu0 0.0
    %715 = vmatpush1.xpose.msra.mxu0 %v712
    %716 = vmatprep.subr.mxu0 0.0
    %717 = vmatpush1.xpose.msra.mxu0 0.0
    %718 = vmatprep.subr.mxu0 0.0
    %719 = vmatpush1.xpose.msra.mxu0 0.0
    %720 = vmatprep.subr.mxu0 0.0
    %721 = vmatpush1.xpose.msra.mxu0 0.0
    %722 = vmatprep.subr.mxu0 0.0
    %723 = vmatpush1.xpose.msra.mxu0 0.0
    %724 = vmatprep.subr.mxu0 0.0
    %725 = vmatpush1.xpose.msra.mxu0 0.0
    %726 = vmatprep.subr.mxu0 0.0
    %727 = vmatpush1.xpose.msra.mxu0 0.0
    %728 = vmatprep.subr.mxu0 0.0
    %729 = vmatpush1.xpose.msra.mxu0 0.0
    %730 = vmatprep.subr.mxu0 0.0
    %731 = vmatpush1.xpose.msra.mxu0 0.0
    %732 = vmatprep.subr.mxu0 0.0
    %733 = vmatpush1.xpose.msra.mxu0 0.0
    %734 = vmatprep.subr.mxu0 0.0
    %735 = vmatpush1.xpose.msra.mxu0 0.0
    %736 = vmatprep.subr.mxu0 0.0
    %737 = vmatpush1.xpose.msra.mxu0 0.0
    %738 = vmatprep.subr.mxu0 0.0
    %739 = vmatpush1.xpose.msra.mxu0 0.0
    %740 = vmatprep.subr.mxu0 0.0
    %741 = vmatpush1.xpose.msra.mxu0 0.0
    %742 = vmatprep.subr.mxu0 0.0
    %743 = vmatpush1.xpose.msra.mxu0 0.0
    %744 = vmatprep.subr.mxu0 0.0
    %745 = vmatpush1.xpose.msra.mxu0 0.0
    %746 = vmatprep.subr.mxu0 0.0
    %747 = vmatpush1.xpose.msra.mxu0 0.0
    %748 = vmatprep.subr.mxu0 0.0
    %749 = vmatpush1.xpose.msra.mxu0 0.0
    %750 = vmatprep.subr.mxu0 0.0
    %751 = vmatpush1.xpose.msra.mxu0 0.0
    %752 = vmatprep.subr.mxu0 0.0
    %753 = vmatpush1.xpose.msra.mxu0 0.0
    %754 = vmatprep.subr.mxu0 0.0
    %755 = vmatpush1.xpose.msra.mxu0 0.0
    %756 = vmatprep.subr.mxu0 0.0
    %757 = vmatpush1.xpose.msra.mxu0 0.0
    %758 = vmatprep.subr.mxu0 0.0
    %759 = vmatpush1.xpose.msra.mxu0 0.0
    %760 = vmatprep.subr.mxu0 0.0
    %761 = vmatpush1.xpose.msra.mxu0 0.0
    %762 = vmatprep.subr.mxu0 0.0
    %763 = vmatpush1.xpose.msra.mxu0 0.0
    %764 = vmatprep.subr.mxu0 0.0
    %765 = vmatpush1.xpose.msra.mxu0 0.0
    %766 = vmatprep.subr.mxu0 0.0
    %767 = vmatpush1.xpose.msra.mxu0 0.0
    %768 = vmatprep.subr.mxu0 0.0
    %769 = vmatpush1.xpose.msra.mxu0 0.0
    %770 = vmatprep.subr.mxu0 0.0
    %771 = vmatpush1.xpose.msra.mxu0 0.0
    %772 = vmatprep.subr.mxu0 0.0
    %773 = vmatpush1.xpose.msra.mxu0 0.0
    %774 = vmatprep.subr.mxu0 0.0
    %775 = vmatpush1.xpose.msra.mxu0 0.0
    %776 = vmatprep.subr.mxu0 0.0
    %777 = vmatpush1.xpose.msra.mxu0 0.0
    %778 = vmatprep.mubr.f32.mxu0 0.0
    %779 = vmatmul.mubr.f32.gmra.mrb[0].mxu0 %v709
    %v780 = vpop.f32.mrb[0].mxu0
    %v781 = vadd.f32 %v680, %v780
    %v782 = vpop.f32.mrb[0].mxu0
    %783 = vdwg.mxu0
    %v784 = vsel %vm103, %v708, 0
    %v787 = vsel %vm103, %v679, 0
    %789 = vmatprep.subr.mxu0 0.0
    %790 = vmatpush1.xpose.msra.mxu0 %v787
    %791 = vmatprep.subr.mxu0 0.0
    %792 = vmatpush1.xpose.msra.mxu0 0.0
    %793 = vmatprep.subr.mxu0 0.0
    %794 = vmatpush1.xpose.msra.mxu0 0.0
    %795 = vmatprep.subr.mxu0 0.0
    %796 = vmatpush1.xpose.msra.mxu0 0.0
    %797 = vmatprep.subr.mxu0 0.0
    %798 = vmatpush1.xpose.msra.mxu0 0.0
    %799 = vmatprep.subr.mxu0 0.0
    %800 = vmatpush1.xpose.msra.mxu0 0.0
    %801 = vmatprep.subr.mxu0 0.0
    %802 = vmatpush1.xpose.msra.mxu0 0.0
    %803 = vmatprep.subr.mxu0 0.0
    %804 = vmatpush1.xpose.msra.mxu0 0.0
    %805 = vmatprep.subr.mxu0 0.0
    %806 = vmatpush1.xpose.msra.mxu0 0.0
    %807 = vmatprep.subr.mxu0 0.0
    %808 = vmatpush1.xpose.msra.mxu0 0.0
    %809 = vmatprep.subr.mxu0 0.0
    %810 = vmatpush1.xpose.msra.mxu0 0.0
    %811 = vmatprep.subr.mxu0 0.0
    %812 = vmatpush1.xpose.msra.mxu0 0.0
    %813 = vmatprep.subr.mxu0 0.0
    %814 = vmatpush1.xpose.msra.mxu0 0.0
    %815 = vmatprep.subr.mxu0 0.0
    %816 = vmatpush1.xpose.msra.mxu0 0.0
    %817 = vmatprep.subr.mxu0 0.0
    %818 = vmatpush1.xpose.msra.mxu0 0.0
    %819 = vmatprep.subr.mxu0 0.0
    %820 = vmatpush1.xpose.msra.mxu0 0.0
    %821 = vmatprep.subr.mxu0 0.0
    %822 = vmatpush1.xpose.msra.mxu0 0.0
    %823 = vmatprep.subr.mxu0 0.0
    %824 = vmatpush1.xpose.msra.mxu0 0.0
    %825 = vmatprep.subr.mxu0 0.0
    %826 = vmatpush1.xpose.msra.mxu0 0.0
    %827 = vmatprep.subr.mxu0 0.0
    %828 = vmatpush1.xpose.msra.mxu0 0.0
    %829 = vmatprep.subr.mxu0 0.0
    %830 = vmatpush1.xpose.msra.mxu0 0.0
    %831 = vmatprep.subr.mxu0 0.0
    %832 = vmatpush1.xpose.msra.mxu0 0.0
    %833 = vmatprep.subr.mxu0 0.0
    %834 = vmatpush1.xpose.msra.mxu0 0.0
    %835 = vmatprep.subr.mxu0 0.0
    %836 = vmatpush1.xpose.msra.mxu0 0.0
    %837 = vmatprep.subr.mxu0 0.0
    %838 = vmatpush1.xpose.msra.mxu0 0.0
    %839 = vmatprep.subr.mxu0 0.0
    %840 = vmatpush1.xpose.msra.mxu0 0.0
    %841 = vmatprep.subr.mxu0 0.0
    %842 = vmatpush1.xpose.msra.mxu0 0.0
    %843 = vmatprep.subr.mxu0 0.0
    %844 = vmatpush1.xpose.msra.mxu0 0.0
    %845 = vmatprep.subr.mxu0 0.0
    %846 = vmatpush1.xpose.msra.mxu0 0.0
    %847 = vmatprep.subr.mxu0 0.0
    %848 = vmatpush1.xpose.msra.mxu0 0.0
    %849 = vmatprep.subr.mxu0 0.0
    %850 = vmatpush1.xpose.msra.mxu0 0.0
    %851 = vmatprep.subr.mxu0 0.0
    %852 = vmatpush1.xpose.msra.mxu0 0.0
    %853 = vmatprep.mubr.f32.mxu0 0.0
    %854 = vmatmul.mubr.f32.gmra.mrb[0].mxu0 %v784
    %v855 = vpop.f32.mrb[0].mxu0
    %v856 = vadd.f32 %v681, %v855
    %v857 = vpop.f32.mrb[0].mxu0
    %858 = vdwg.mxu0
    %v859 = vmax.f32 %v781, 0.0
    %v860 = vmax.f32 %v856, 0.0
    %v861 = vmul.f32 %v682, %v859
    %v862 = vmul.f32 %v683, %v860
    %v863 = vmul.f32 %v684, %v781
    %v864 = vmul.f32 %v685, %v856
    %v865 = vsub.f32 %v861, %v863
    %v866 = vsub.f32 %v862, %v864
    %v867 = vand.u32 2147483647, %v781
    %v868 = vand.u32 2147483647, %v856
    %v869 = vsub.f32 0.0, %v867
    %v870 = vsub.f32 0.0, %v868
    %v871 = vmul.f32 %v869, 1.442695
    %v872 = vpow.pop %v871
    %v873 = vmul.f32 %v870, 1.442695
    %v874 = vpow.pop %v873
    %v875 = vadd.f32 %v872, 1.0
    %v876 = vlog2.pop %v875
    %v877 = vmul.f32 %v876, 0.6931472
    %v878 = vmul.f32 -0.5, %v872
    %v879 = vadd.f32 %v878, 1.0
    %v880 = vmul.f32 %v879, %v872
    %v881 = vand.u32 2147483647, %v872
    %vm882 = vcmp.lt.f32.partialorder %v881, 0.0004427343
    %v883 = vsel %vm882, %v880, %v877
    %v884 = vadd.f32 %v874, 1.0
    %v885 = vlog2.pop %v884
    %v886 = vmul.f32 %v885, 0.6931472
    %v887 = vmul.f32 -0.5, %v874
    %v888 = vadd.f32 %v887, 1.0
    %v889 = vmul.f32 %v888, %v874
    %v890 = vand.u32 2147483647, %v874
    %vm891 = vcmp.lt.f32.partialorder %v890, 0.0004427343
    %v892 = vsel %vm891, %v889, %v886
    %v893 = vmul.f32 %v682, %v883
    %v894 = vmul.f32 %v683, %v892
    %v895 = vadd.f32 %v865, %v893
    %v896 = vadd.f32 %v866, %v894
    %vm897 = vcmask 16384
    %v898 = vsel %vm897, %v895, 0.0
    %v899 = vsel %vm897, %v896, 0.0
    %v900 = vadd.f32 %v898, %v899
    %901 = vadd.xlane.f32.xlu0 %v900
    %v902 = vpop.xlane.xlu0 %901
    %v903 = vrot.slane %v902, 4
    %v904 = vadd.f32 %v902, %v903
    %v905 = vrot.slane %v904, 2
    %v906 = vadd.f32 %v904, %v905
    %v907 = vrot.slane %v906, 1
    %v908 = vadd.f32 %v906, %v907
    %s909 = vtos %v908
    %s910 = sadd.f32 %s677, %s909
    %s911 = scalar_lea.smem [#allocation2], 0
    %912 = sst [smem:[%s911]] %s910
    // Predicated region
    $region74: #{tpu_custom_call.1} parent=1 // pred_check
      _
    $region75: #{tpu_custom_call.1} parent=1 // pred_check_branch
      %914 = sbr.rel (0) target = $region77
    $region76: #{tpu_custom_call.1} parent=1 // pred_region
      %s916 = ssub.s32 16, 16
      %917 = vsyncadd [#allocation3], %s916
      %920 = dma.smem_to_hbm [#allocation2], 16, %s18, [#allocation3]
    $region77: #{tpu_custom_call.1} parent=1 // pred_fallthru
      _
    // Predicated region
    $region78: #{tpu_custom_call.1} parent=1 // pred_check
      _
    $region79: #{tpu_custom_call.1} parent=1 // pred_check_branch
      %922 = sbr.rel (0) target = $region81
    $region80: #{tpu_custom_call.1} parent=1 // pred_region
      %923 = dma.done [#allocation3], 16
    $region81: #{tpu_custom_call.1} parent=1 // pred_fallthru
      _
    %924 = sfence
    %925 = vsyncpa [#allocation3], 1

</llo_original>
